<compile_context>
chip_gen: v5e
topology: v5e:2x2
jax: 0.10.0
libtpu: 0.0.40
codegen_flags: <defaults>
</compile_context>

<pallas_src>
import functools

import jax
import jax.numpy as jnp
from jax.experimental import pallas as pl
from jax.experimental.pallas import tpu as pltpu


def _round_up(x, m):
    return ((x + m - 1) // m) * m


def _edge_encoder_kernel(x_ref, w1_ref, w2_ref, mask_ref, o_ref, p2_ref,
                         *, H, W, c0, pad):
    """Fused EdgeEncoder forward for one batch element.

    x_ref    : (1, cin_p, HW)   laplacian, channel-major flat spatial, channel rows
                                zero-padded to a sublane multiple (cin_p)
    w1_ref   : (c0_p, 9*cin_p)  layer-1 weights, K ordered (kh, kw, ci); zero-padded
    w2_ref   : (c1, 9*c0_p)     layer-2 weights, K ordered (kh, kw, ci); zero-padded
    mask_ref : (2, HW) f32      [0]: col-1 is in range, [1]: col+1 is in range
    o_ref    : (1, c0+c1, HW)   concat([edge1, edge2], channel dim)
    p2_ref   : (9*c0_p, HW)     VMEM im2col operand for layer 2 (MXU dtype)
    """
    HW = H * W
    masks = mask_ref[...]
    left_ok = masks[0:1, :]      # (1, HW): this position may read its col-1 neighbour
    right_ok = masks[1:2, :]     # (1, HW): this position may read its col+1 neighbour
    mxu_dtype = w1_ref.dtype

    def silu(v):
        return v * jax.nn.sigmoid(v)

    def shifted_taps(src):
        # src: (c, HW) f32 with zero-padded channel rows.  Build the 9 conv taps as
        # static slices of a value-level, lane-aligned zero-padded slab: no halo
        # stores into VMEM, no misaligned VMEM loads (relayout stays on vregs/XLU).
        c = src.shape[0]
        halo = jnp.zeros((c, pad), jnp.float32)
        slab = jnp.concatenate([halo, src, halo], axis=1)        # (c, HW + 2*pad)
        taps = []
        for kh in range(3):
            for kw in range(3):
                d = (kh - 1) * W + (kw - 1)                      # flat shift of this tap
                s = slab[:, pad + d: pad + d + HW]               # (c, HW)
                if kw == 0:
                    s = s * left_ok                              # zero cols where w == 0
                elif kw == 2:
                    s = s * right_ok                             # zero cols where w == W-1
                taps.append(s)
        return taps

    # ---- Layer 1: edge_feats -> conv_dim0 (operand kept as a value) -------------
    x = x_ref[0].astype(jnp.float32)                             # (cin_p, HW)
    p1 = jnp.concatenate(shifted_taps(x), axis=0).astype(mxu_dtype)   # (9*cin_p, HW)
    e1 = silu(jnp.dot(w1_ref[...], p1,
                      preferred_element_type=jnp.float32))       # (c0_p, HW); pad rows == 0

    # ---- Layer 2: conv_dim0 -> conv_dim1 (edge1 never leaves VMEM) ---------------
    c0_p = e1.shape[0]
    for t, s in enumerate(shifted_taps(e1)):
        # t * c0_p is a multiple of 8 -> aligned full-tile stores.
        p2_ref[pl.ds(t * c0_p, c0_p), :] = s.astype(p2_ref.dtype)
    e2 = silu(jnp.dot(w2_ref[...], p2_ref[...],
                      preferred_element_type=jnp.float32))       # (c1, HW)

    # ---- Single aligned output store: c0 + c1 rows -------------------------------
    o_ref[0] = jnp.concatenate([e1[:c0, :], e2], axis=0).astype(o_ref.dtype)


def edge_encoder_forward(lap_nchw, w1_oihw, w2_oihw, *, use_bf16_mxu=False):
    """Fused EdgeEncoder forward: NCHW in -> NCHW out (channels = conv_dim0 + conv_dim1)."""
    B, cin, H, W = lap_nchw.shape
    c0 = w1_oihw.shape[0]
    c1 = w2_oihw.shape[0]
    assert w1_oihw.shape == (c0, cin, 3, 3)
    assert w2_oihw.shape == (c1, c0, 3, 3)
    HW = H * W

    cin_p = _round_up(cin, 8)            # sublane-aligned per-tap channel block (layer 1)
    c0_p = _round_up(c0, 8)              # sublane-aligned per-tap channel block (layer 2)
    pad = _round_up(W + 1, 128)          # lane-aligned halo width for the flat image
    mxu_dtype = jnp.bfloat16 if use_bf16_mxu else jnp.float32

    # Channel-major flat spatial input; channel rows zero-padded to cin_p (tiny pad op).
    x_flat = lap_nchw.reshape(B, cin, HW).astype(jnp.float32)
    x_flat = jnp.pad(x_flat, ((0, 0), (0, cin_p - cin), (0, 0)))

    # Weight repack: K ordered (kh, kw, ci) with ci zero-padded to the sublane multiple,
    # so the matmul contraction matches the padded im2col operands exactly.
    w1t = jnp.transpose(w1_oihw, (0, 2, 3, 1))                       # (c0, 3, 3, cin)
    w1p = jnp.pad(w1t, ((0, c0_p - c0), (0, 0), (0, 0), (0, cin_p - cin)))
    w1p = w1p.reshape(c0_p, 9 * cin_p).astype(mxu_dtype)             # pad out-rows -> e1 pad rows = 0
    w2t = jnp.transpose(w2_oihw, (0, 2, 3, 1))                       # (c1, 3, 3, c0)
    w2p = jnp.pad(w2t, ((0, 0), (0, 0), (0, 0), (0, c0_p - c0)))
    w2p = w2p.reshape(c1, 9 * c0_p).astype(mxu_dtype)

    # Column-boundary masks for horizontal taps (precomputed, resident in VMEM).
    col = jnp.arange(HW, dtype=jnp.int32) % W
    colmask = jnp.stack([(col >= 1), (col <= W - 2)]).astype(jnp.float32)   # (2, HW)

    kernel = functools.partial(_edge_encoder_kernel, H=H, W=W, c0=c0, pad=pad)

    out = pl.pallas_call(
        kernel,
        out_shape=jax.ShapeDtypeStruct((B, c0 + c1, HW), lap_nchw.dtype),
        grid_spec=pltpu.PrefetchScalarGridSpec(
            num_scalar_prefetch=0,
            grid=(B,),
            in_specs=[
                pl.BlockSpec((1, cin_p, HW), lambda b: (b, 0, 0)),
                pl.BlockSpec((c0_p, 9 * cin_p), lambda b: (0, 0)),   # resident weights
                pl.BlockSpec((c1, 9 * c0_p), lambda b: (0, 0)),      # resident weights
                pl.BlockSpec((2, HW), lambda b: (0, 0)),             # resident masks
            ],
            out_specs=pl.BlockSpec((1, c0 + c1, HW), lambda b: (b, 0, 0)),
            scratch_shapes=[
                pltpu.VMEM((9 * c0_p, HW), mxu_dtype),               # layer-2 im2col operand
            ],
        ),
        compiler_params=pltpu.CompilerParams(
            dimension_semantics=("parallel",),                       # v7x: shard B over 2 TCs
        ),
    )(x_flat, w1p, w2p, colmask)

    # Channel-major flat output -> NCHW is a pure reshape (no transpose needed).
    return out.reshape(B, c0 + c1, H, W)


class EdgeEncoderPallas:
    """JAX/Pallas port of EdgeEncoder (raw_laplacian=None path, eval mode)."""

    def __init__(self, out_dim: int, edge_feats: int, key, use_bf16_mxu: bool = False):
        assert out_dim > edge_feats
        conv_dim0 = int(out_dim / 3 * 2)        # matches torch source (float division)
        conv_dim1 = int(out_dim - conv_dim0)
        k1, k2 = jax.random.split(key)
        # Deterministic synthetic init; nn.Conv2d weight layout (Cout, Cin, 3, 3).
        self.w1 = jax.random.normal(k1, (conv_dim0, edge_feats, 3, 3), jnp.float32) * 0.1
        self.w2 = jax.random.normal(k2, (conv_dim1, conv_dim0, 3, 3), jnp.float32) * 0.1
        self._fwd = jax.jit(functools.partial(edge_encoder_forward,
                                              use_bf16_mxu=use_bf16_mxu))

    def __call__(self, lap_nchw):
        return self._fwd(lap_nchw, self.w1, self.w2)


def _reference_forward(lap_nchw, w1, w2):
    """Pure-JAX reference (lax conv, HIGHEST precision) for correctness checking."""
    def block(x, w):
        y = jax.lax.conv_general_dilated(
            x, w, window_strides=(1, 1), padding="SAME",
            dimension_numbers=("NCHW", "OIHW", "NCHW"),
            precision=jax.lax.Precision.HIGHEST)
        return y * jax.nn.sigmoid(y)
    e1 = block(lap_nchw, w1)
    e2 = block(e1, w2)
    return jnp.concatenate([e1, e2], axis=1)


if __name__ == "__main__":
    key = jax.random.PRNGKey(0)
    k_param, k_data = jax.random.split(key)

    out_dim, edge_feats = 32, 4      # conv_dim0 = 21, conv_dim1 = 11
    B, H, W = 2, 16, 16

    enc = EdgeEncoderPallas(out_dim, edge_feats, k_param)
    lap = jax.random.normal(k_data, (B, edge_feats, H, W), jnp.float32)

    ref = _reference_forward(lap, enc.w1, enc.w2)

    # f32-operand path (default; safe on all generations).
    out = jax.block_until_ready(enc(lap))
    assert out.shape == (B, out_dim, H, W), out.shape
    assert jnp.allclose(out, ref, atol=5e-3, rtol=5e-3), \
        f"f32 path mismatch: max abs err = {jnp.max(jnp.abs(out - ref))}"

    # bf16-MXU-operand path (v6e/v7x-friendly); f32 accumulate, looser tolerance.
    out_bf16 = jax.block_until_ready(
        jax.jit(functools.partial(edge_encoder_forward, use_bf16_mxu=True))(
            lap, enc.w1, enc.w2))
    assert out_bf16.shape == (B, out_dim, H, W), out_bf16.shape
    assert jnp.allclose(out_bf16, ref, atol=5e-2, rtol=5e-2), \
        f"bf16 path mismatch: max abs err = {jnp.max(jnp.abs(out_bf16 - ref))}"

    print("KERNEL_OK")
</pallas_src>

<mosaic_0001>
module attributes {stable_mosaic.version = 11 : i64} {
  func.func @_edge_encoder_kernel(%arg0: i32, %arg1: memref<1x8x256xf32, #tpu.memory_space<vmem>>, %arg2: memref<24x72xf32, #tpu.memory_space<vmem>>, %arg3: memref<11x216xf32, #tpu.memory_space<vmem>>, %arg4: memref<2x256xf32, #tpu.memory_space<vmem>>, %arg5: memref<1x32x256xf32, #tpu.memory_space<vmem>>, %arg6: memref<216x256xf32, #tpu.memory_space<vmem>>) attributes {dimension_semantics = [#tpu.dimension_semantics<parallel>], iteration_bounds = array<i64: 2>, scalar_prefetch = 0 : i64, scratch_operands = 1 : i64, tpu.core_type = #tpu.core_type<tc>, window_params = [{transform_indices = @transform_0, window_bounds = array<i64: 1, 8, 256>}, {pipeline_mode = #tpu.pipeline_mode<synchronous>, transform_indices = @transform_1, window_bounds = array<i64: 24, 72>}, {pipeline_mode = #tpu.pipeline_mode<synchronous>, transform_indices = @transform_2, window_bounds = array<i64: 11, 216>}, {pipeline_mode = #tpu.pipeline_mode<synchronous>, transform_indices = @transform_3, window_bounds = array<i64: 2, 256>}, {transform_indices = @transform_4, window_bounds = array<i64: 1, 32, 256>}]} {
    %c0 = arith.constant 0 : index
    %c0_0 = arith.constant 0 : index
    %0 = vector.load %arg4[%c0, %c0_0] : memref<2x256xf32, #tpu.memory_space<vmem>>, vector<2x256xf32>
    %1 = vector.extract_strided_slice %0 {offsets = [0, 0], sizes = [1, 256], strides = [1, 1]} : vector<2x256xf32> to vector<1x256xf32>
    %2 = vector.extract_strided_slice %0 {offsets = [1, 0], sizes = [1, 256], strides = [1, 1]} : vector<2x256xf32> to vector<1x256xf32>
    %c0_1 = arith.constant 0 : index
    %c0_2 = arith.constant 0 : index
    %c0_3 = arith.constant 0 : index
    %3 = vector.load %arg1[%c0_1, %c0_2, %c0_3] : memref<1x8x256xf32, #tpu.memory_space<vmem>>, vector<1x8x256xf32>
    %4 = vector.shape_cast %3 : vector<1x8x256xf32> to vector<8x256xf32>
    %cst = arith.constant 0.000000e+00 : f32
    %5 = vector.broadcast %cst : f32 to vector<8x128xf32>
    %6 = tpu.concatenate %5, %4, %5 in 1 : vector<8x128xf32>, vector<8x256xf32>, vector<8x128xf32> -> vector<8x512xf32>
    %7 = vector.extract_strided_slice %6 {offsets = [0, 111], sizes = [8, 256], strides = [1, 1]} : vector<8x512xf32> to vector<8x256xf32>
    %8 = vector.broadcast %1 : vector<1x256xf32> to vector<8x256xf32>
    %9 = arith.mulf %7, %8 : vector<8x256xf32>
    %10 = vector.extract_strided_slice %6 {offsets = [0, 112], sizes = [8, 256], strides = [1, 1]} : vector<8x512xf32> to vector<8x256xf32>
    %11 = vector.extract_strided_slice %6 {offsets = [0, 113], sizes = [8, 256], strides = [1, 1]} : vector<8x512xf32> to vector<8x256xf32>
    %12 = vector.broadcast %2 : vector<1x256xf32> to vector<8x256xf32>
    %13 = arith.mulf %11, %12 : vector<8x256xf32>
    %14 = vector.extract_strided_slice %6 {offsets = [0, 127], sizes = [8, 256], strides = [1, 1]} : vector<8x512xf32> to vector<8x256xf32>
    %15 = vector.broadcast %1 : vector<1x256xf32> to vector<8x256xf32>
    %16 = arith.mulf %14, %15 : vector<8x256xf32>
    %17 = vector.extract_strided_slice %6 {offsets = [0, 128], sizes = [8, 256], strides = [1, 1]} : vector<8x512xf32> to vector<8x256xf32>
    %18 = vector.extract_strided_slice %6 {offsets = [0, 129], sizes = [8, 256], strides = [1, 1]} : vector<8x512xf32> to vector<8x256xf32>
    %19 = vector.broadcast %2 : vector<1x256xf32> to vector<8x256xf32>
    %20 = arith.mulf %18, %19 : vector<8x256xf32>
    %21 = vector.extract_strided_slice %6 {offsets = [0, 143], sizes = [8, 256], strides = [1, 1]} : vector<8x512xf32> to vector<8x256xf32>
    %22 = vector.broadcast %1 : vector<1x256xf32> to vector<8x256xf32>
    %23 = arith.mulf %21, %22 : vector<8x256xf32>
    %24 = vector.extract_strided_slice %6 {offsets = [0, 144], sizes = [8, 256], strides = [1, 1]} : vector<8x512xf32> to vector<8x256xf32>
    %25 = vector.extract_strided_slice %6 {offsets = [0, 145], sizes = [8, 256], strides = [1, 1]} : vector<8x512xf32> to vector<8x256xf32>
    %26 = vector.broadcast %2 : vector<1x256xf32> to vector<8x256xf32>
    %27 = arith.mulf %25, %26 : vector<8x256xf32>
    %28 = tpu.concatenate %9, %10, %13, %16, %17, %20, %23, %24, %27 in 0 : vector<8x256xf32>, vector<8x256xf32>, vector<8x256xf32>, vector<8x256xf32>, vector<8x256xf32>, vector<8x256xf32>, vector<8x256xf32>, vector<8x256xf32>, vector<8x256xf32> -> vector<72x256xf32>
    %c0_4 = arith.constant 0 : index
    %c0_5 = arith.constant 0 : index
    %29 = vector.load %arg2[%c0_4, %c0_5] : memref<24x72xf32, #tpu.memory_space<vmem>>, vector<24x72xf32>
    %cst_6 = arith.constant dense<0.000000e+00> : vector<24x256xf32>
    %30 = tpu.matmul %29, %28, %cst_6 {dimension_numbers = #tpu.dot_dimension_numbers<[1], [0], [0], [1], [0, 0, 1, 1], [], []>} : vector<24x72xf32>, vector<72x256xf32>, vector<24x256xf32> -> vector<24x256xf32>
    %31 = arith.negf %30 : vector<24x256xf32>
    %32 = math.exp %31 : vector<24x256xf32>
    %cst_7 = arith.constant 1.000000e+00 : f32
    %33 = vector.broadcast %cst_7 : f32 to vector<24x256xf32>
    %34 = arith.addf %33, %32 : vector<24x256xf32>
    %35 = arith.divf %33, %34 : vector<24x256xf32>
    %36 = arith.mulf %30, %35 : vector<24x256xf32>
    %cst_8 = arith.constant 0.000000e+00 : f32
    %37 = vector.broadcast %cst_8 : f32 to vector<24x128xf32>
    %38 = tpu.concatenate %37, %36, %37 in 1 : vector<24x128xf32>, vector<24x256xf32>, vector<24x128xf32> -> vector<24x512xf32>
    %39 = vector.extract_strided_slice %38 {offsets = [0, 111], sizes = [24, 256], strides = [1, 1]} : vector<24x512xf32> to vector<24x256xf32>
    %40 = vector.broadcast %1 : vector<1x256xf32> to vector<24x256xf32>
    %41 = arith.mulf %39, %40 : vector<24x256xf32>
    %42 = vector.extract_strided_slice %38 {offsets = [0, 112], sizes = [24, 256], strides = [1, 1]} : vector<24x512xf32> to vector<24x256xf32>
    %43 = vector.extract_strided_slice %38 {offsets = [0, 113], sizes = [24, 256], strides = [1, 1]} : vector<24x512xf32> to vector<24x256xf32>
    %44 = vector.broadcast %2 : vector<1x256xf32> to vector<24x256xf32>
    %45 = arith.mulf %43, %44 : vector<24x256xf32>
    %46 = vector.extract_strided_slice %38 {offsets = [0, 127], sizes = [24, 256], strides = [1, 1]} : vector<24x512xf32> to vector<24x256xf32>
    %47 = vector.broadcast %1 : vector<1x256xf32> to vector<24x256xf32>
    %48 = arith.mulf %46, %47 : vector<24x256xf32>
    %49 = vector.extract_strided_slice %38 {offsets = [0, 128], sizes = [24, 256], strides = [1, 1]} : vector<24x512xf32> to vector<24x256xf32>
    %50 = vector.extract_strided_slice %38 {offsets = [0, 129], sizes = [24, 256], strides = [1, 1]} : vector<24x512xf32> to vector<24x256xf32>
    %51 = vector.broadcast %2 : vector<1x256xf32> to vector<24x256xf32>
    %52 = arith.mulf %50, %51 : vector<24x256xf32>
    %53 = vector.extract_strided_slice %38 {offsets = [0, 143], sizes = [24, 256], strides = [1, 1]} : vector<24x512xf32> to vector<24x256xf32>
    %54 = vector.broadcast %1 : vector<1x256xf32> to vector<24x256xf32>
    %55 = arith.mulf %53, %54 : vector<24x256xf32>
    %56 = vector.extract_strided_slice %38 {offsets = [0, 144], sizes = [24, 256], strides = [1, 1]} : vector<24x512xf32> to vector<24x256xf32>
    %57 = vector.extract_strided_slice %38 {offsets = [0, 145], sizes = [24, 256], strides = [1, 1]} : vector<24x512xf32> to vector<24x256xf32>
    %58 = vector.broadcast %2 : vector<1x256xf32> to vector<24x256xf32>
    %59 = arith.mulf %57, %58 : vector<24x256xf32>
    %c0_9 = arith.constant 0 : index
    %c0_10 = arith.constant 0 : index
    %60 = vector.load %arg6[%c0_9, %c0_10] : memref<216x256xf32, #tpu.memory_space<vmem>>, vector<24x256xf32>
    tpu.vector_store %arg6[%c0_9, %c0_10], %41 {strides = array<i32>} : memref<216x256xf32, #tpu.memory_space<vmem>>, vector<24x256xf32>,
    %c24 = arith.constant 24 : index
    %c0_11 = arith.constant 0 : index
    %61 = vector.load %arg6[%c24, %c0_11] : memref<216x256xf32, #tpu.memory_space<vmem>>, vector<24x256xf32>
    tpu.vector_store %arg6[%c24, %c0_11], %42 {strides = array<i32>} : memref<216x256xf32, #tpu.memory_space<vmem>>, vector<24x256xf32>,
    %c48 = arith.constant 48 : index
    %c0_12 = arith.constant 0 : index
    %62 = vector.load %arg6[%c48, %c0_12] : memref<216x256xf32, #tpu.memory_space<vmem>>, vector<24x256xf32>
    tpu.vector_store %arg6[%c48, %c0_12], %45 {strides = array<i32>} : memref<216x256xf32, #tpu.memory_space<vmem>>, vector<24x256xf32>,
    %c72 = arith.constant 72 : index
    %c0_13 = arith.constant 0 : index
    %63 = vector.load %arg6[%c72, %c0_13] : memref<216x256xf32, #tpu.memory_space<vmem>>, vector<24x256xf32>
    tpu.vector_store %arg6[%c72, %c0_13], %48 {strides = array<i32>} : memref<216x256xf32, #tpu.memory_space<vmem>>, vector<24x256xf32>,
    %c96 = arith.constant 96 : index
    %c0_14 = arith.constant 0 : index
    %64 = vector.load %arg6[%c96, %c0_14] : memref<216x256xf32, #tpu.memory_space<vmem>>, vector<24x256xf32>
    tpu.vector_store %arg6[%c96, %c0_14], %49 {strides = array<i32>} : memref<216x256xf32, #tpu.memory_space<vmem>>, vector<24x256xf32>,
    %c120 = arith.constant 120 : index
    %c0_15 = arith.constant 0 : index
    %65 = vector.load %arg6[%c120, %c0_15] : memref<216x256xf32, #tpu.memory_space<vmem>>, vector<24x256xf32>
    tpu.vector_store %arg6[%c120, %c0_15], %52 {strides = array<i32>} : memref<216x256xf32, #tpu.memory_space<vmem>>, vector<24x256xf32>,
    %c144 = arith.constant 144 : index
    %c0_16 = arith.constant 0 : index
    %66 = vector.load %arg6[%c144, %c0_16] : memref<216x256xf32, #tpu.memory_space<vmem>>, vector<24x256xf32>
    tpu.vector_store %arg6[%c144, %c0_16], %55 {strides = array<i32>} : memref<216x256xf32, #tpu.memory_space<vmem>>, vector<24x256xf32>,
    %c168 = arith.constant 168 : index
    %c0_17 = arith.constant 0 : index
    %67 = vector.load %arg6[%c168, %c0_17] : memref<216x256xf32, #tpu.memory_space<vmem>>, vector<24x256xf32>
    tpu.vector_store %arg6[%c168, %c0_17], %56 {strides = array<i32>} : memref<216x256xf32, #tpu.memory_space<vmem>>, vector<24x256xf32>,
    %c192 = arith.constant 192 : index
    %c0_18 = arith.constant 0 : index
    %68 = vector.load %arg6[%c192, %c0_18] : memref<216x256xf32, #tpu.memory_space<vmem>>, vector<24x256xf32>
    tpu.vector_store %arg6[%c192, %c0_18], %59 {strides = array<i32>} : memref<216x256xf32, #tpu.memory_space<vmem>>, vector<24x256xf32>,
    %c0_19 = arith.constant 0 : index
    %c0_20 = arith.constant 0 : index
    %69 = vector.load %arg3[%c0_19, %c0_20] : memref<11x216xf32, #tpu.memory_space<vmem>>, vector<11x216xf32>
    %c0_21 = arith.constant 0 : index
    %c0_22 = arith.constant 0 : index
    %70 = vector.load %arg6[%c0_21, %c0_22] : memref<216x256xf32, #tpu.memory_space<vmem>>, vector<216x256xf32>
    %cst_23 = arith.constant dense<0.000000e+00> : vector<11x256xf32>
    %71 = tpu.matmul %69, %70, %cst_23 {dimension_numbers = #tpu.dot_dimension_numbers<[1], [0], [0], [1], [0, 0, 1, 1], [], []>} : vector<11x216xf32>, vector<216x256xf32>, vector<11x256xf32> -> vector<11x256xf32>
    %72 = arith.negf %71 : vector<11x256xf32>
    %73 = math.exp %72 : vector<11x256xf32>
    %cst_24 = arith.constant 1.000000e+00 : f32
    %74 = vector.broadcast %cst_24 : f32 to vector<11x256xf32>
    %75 = arith.addf %74, %73 : vector<11x256xf32>
    %76 = arith.divf %74, %75 : vector<11x256xf32>
    %77 = arith.mulf %71, %76 : vector<11x256xf32>
    %78 = vector.extract_strided_slice %36 {offsets = [0, 0], sizes = [21, 256], strides = [1, 1]} : vector<24x256xf32> to vector<21x256xf32>
    %79 = tpu.concatenate %78, %77 in 0 : vector<21x256xf32>, vector<11x256xf32> -> vector<32x256xf32>
    %c0_25 = arith.constant 0 : index
    %c0_26 = arith.constant 0 : index
    %c0_27 = arith.constant 0 : index
    %80 = vector.load %arg5[%c0_25, %c0_26, %c0_27] : memref<1x32x256xf32, #tpu.memory_space<vmem>>, vector<1x32x256xf32>
    %81 = vector.shape_cast %80 : vector<1x32x256xf32> to vector<32x256xf32>
    %82 = vector.shape_cast %79 : vector<32x256xf32> to vector<1x32x256xf32>
    tpu.vector_store %arg5[%c0_25, %c0_26, %c0_27], %82 {strides = array<i32>} : memref<1x32x256xf32, #tpu.memory_space<vmem>>, vector<1x32x256xf32>,
    return
  }
  func.func @transform_0(%arg0: i32) -> (i32, i32, i32) {
    %c0_i32 = arith.constant 0 : i32
    %c0_i32_0 = arith.constant 0 : i32
    %c0_i32_1 = arith.constant 0 : i32
    return %arg0, %c0_i32, %c0_i32_0 : i32, i32, i32
  }
  func.func @transform_1(%arg0: i32) -> (i32, i32) {
    %c0_i32 = arith.constant 0 : i32
    %c0_i32_0 = arith.constant 0 : i32
    %c0_i32_1 = arith.constant 0 : i32
    return %c0_i32, %c0_i32_0 : i32, i32
  }
  func.func @transform_2(%arg0: i32) -> (i32, i32) {
    %c0_i32 = arith.constant 0 : i32
    %c0_i32_0 = arith.constant 0 : i32
    %c0_i32_1 = arith.constant 0 : i32
    return %c0_i32, %c0_i32_0 : i32, i32
  }
  func.func @transform_3(%arg0: i32) -> (i32, i32) {
    %c0_i32 = arith.constant 0 : i32
    %c0_i32_0 = arith.constant 0 : i32
    %c0_i32_1 = arith.constant 0 : i32
    return %c0_i32, %c0_i32_0 : i32, i32
  }
  func.func @transform_4(%arg0: i32) -> (i32, i32, i32) {
    %c0_i32 = arith.constant 0 : i32
    %c0_i32_0 = arith.constant 0 : i32
    %c0_i32_1 = arith.constant 0 : i32
    return %arg0, %c0_i32, %c0_i32_0 : i32, i32, i32
  }
}

</mosaic_0001>

<llo_original>
// kernel: edge_encoder_forward.1
$region0: #{edge_encoder_forward.1}
  #allocation0 [shape = 'u32[]', space=smem, size = 0x4, offset = 0x4, fixed_abs, tag = 'smem constant byte address 0x4 - core index']
  #allocation1 [shape = 'u32[72,128]{1,0:T(1,128)}', space=vmem, size = 0x9000, scoped, tag = 'internal scratch']
  #allocation2 [shape = 'f32[216,256]{1,0:T(8,128)}', space=vmem, size = 0x36000, scoped, tag = 'scratch operand']
  %s0 = inlined_call_operand.vmem [shape: f32[2,8,256], index: 0, kind: input, shape index: {}]
  %s1 = inlined_call_operand.vmem [shape: f32[24,72], index: 1, kind: input, shape index: {}]
  %s2 = inlined_call_operand.vmem [shape: f32[11,216], index: 2, kind: input, shape index: {}]
  %s3 = inlined_call_operand.vmem [shape: f32[2,256], index: 3, kind: input, shape index: {}]
  %s4 = inlined_call_operand.vmem [shape: f32[2,32,256], index: 4, kind: output, shape index: {}]
  %s5 = sld [smem:[#allocation0]]
  $region49: #{edge_encoder_forward.1} parent=0
    _
  %s7 = ssub.s32 1, %s5
  %s8 = scalar_select 0, %s7, %s5
  loop: start=0, step=1, limit=4
  $region2: #{edge_encoder_forward.1} parent=0 // loop_pre_header
    _
  $region3: #{edge_encoder_forward.1} parent=0 // loop_header
    %s10 = sphi 0, %s14
    %p11 = scmp.ge.s32.totalorder %s10, 4
    %s20 = sphi 0, %s22
    %s23 = sphi 0, %s20
    %s24 = sphi 0, %s23
    %s40 = sphi 0, %s24
    %s44 = sphi 0, %s44
    %s46 = sphi 0, %s44
    %s47 = sphi 0, %s46
    %s61 = sphi 0, %s47
    %s65 = sphi 0, %s65
    %s67 = sphi 0, %s65
    %s68 = sphi 0, %s67
    %s82 = sphi 0, %s68
    %s86 = sphi 0, %s86
    %s88 = sphi 0, %s86
    %s89 = sphi 0, %s88
    %s103 = sphi 0, %s89
    %s109 = sphi 0, %s111
    %s112 = sphi 0, %s109
    %s113 = sphi 0, %s112
    %s129 = sphi 0, %s113
  $region4: #{edge_encoder_forward.1} parent=0 // loop_header_branch
    %13 = sbr.rel (%p11) target = $region8
  $region5: #{edge_encoder_forward.1} parent=0 // loop_body
    %s15 = ssub.s32 %s10, 1
    %s16 = ssub.s32 %s10, 2
    %s17 = sadd.s32 %s10, 1
    %s18 = ssub.s32 %s10, %s17
    %p19 = scmp.eq.s32.totalorder %s18, 0
    %s21 = sadd.s32 %s20, 1
    %s22 = scalar_select %p19, %s20, %s21
    %p25 = pneg %p19
    %p26 = scmp.eq.s32.totalorder %s10, 1
    %p27 = por %p25, %p26
    %p28 = scmp.ne.s32.totalorder %s20, %s23
    %p29 = scmp.eq.s32.totalorder %s10, 0
    %p30 = por %p28, %p29
    %p31 = scmp.ne.s32.totalorder %s20, %s23
    %p32 = scmp.eq.s32.totalorder %s15, 1
    %p33 = por %p31, %p32
    %p34 = scmp.ne.s32.totalorder %s23, %s24
    %p35 = scmp.eq.s32.totalorder %s15, 0
    %p36 = por %p34, %p35
    %p37 = scmp.ne.s32.totalorder %s23, %s24
    %p38 = scmp.eq.s32.totalorder %s16, 1
    %p39 = por %p37, %p38
    %p41 = scmp.ne.s32.totalorder %s24, %s40
    %p42 = scmp.eq.s32.totalorder %s16, 0
    %p43 = por %p41, %p42
    %s45 = sadd.s32 %s44, 1
    %p48 = scmp.eq.s32.totalorder %s10, 1
    %p49 = scmp.ne.s32.totalorder %s44, %s46
    %p50 = scmp.eq.s32.totalorder %s10, 0
    %p51 = por %p49, %p50
    %p52 = scmp.ne.s32.totalorder %s44, %s46
    %p53 = scmp.eq.s32.totalorder %s15, 1
    %p54 = por %p52, %p53
    %p55 = scmp.ne.s32.totalorder %s46, %s47
    %p56 = scmp.eq.s32.totalorder %s15, 0
    %p57 = por %p55, %p56
    %p58 = scmp.ne.s32.totalorder %s46, %s47
    %p59 = scmp.eq.s32.totalorder %s16, 1
    %p60 = por %p58, %p59
    %p62 = scmp.ne.s32.totalorder %s47, %s61
    %p63 = scmp.eq.s32.totalorder %s16, 0
    %p64 = por %p62, %p63
    %s66 = sadd.s32 %s65, 1
    %p69 = scmp.eq.s32.totalorder %s10, 1
    %p70 = scmp.ne.s32.totalorder %s65, %s67
    %p71 = scmp.eq.s32.totalorder %s10, 0
    %p72 = por %p70, %p71
    %p73 = scmp.ne.s32.totalorder %s65, %s67
    %p74 = scmp.eq.s32.totalorder %s15, 1
    %p75 = por %p73, %p74
    %p76 = scmp.ne.s32.totalorder %s67, %s68
    %p77 = scmp.eq.s32.totalorder %s15, 0
    %p78 = por %p76, %p77
    %p79 = scmp.ne.s32.totalorder %s67, %s68
    %p80 = scmp.eq.s32.totalorder %s16, 1
    %p81 = por %p79, %p80
    %p83 = scmp.ne.s32.totalorder %s68, %s82
    %p84 = scmp.eq.s32.totalorder %s16, 0
    %p85 = por %p83, %p84
    %s87 = sadd.s32 %s86, 1
    %p90 = scmp.eq.s32.totalorder %s10, 1
    %p91 = scmp.ne.s32.totalorder %s86, %s88
    %p92 = scmp.eq.s32.totalorder %s10, 0
    %p93 = por %p91, %p92
    %p94 = scmp.ne.s32.totalorder %s86, %s88
    %p95 = scmp.eq.s32.totalorder %s15, 1
    %p96 = por %p94, %p95
    %p97 = scmp.ne.s32.totalorder %s88, %s89
    %p98 = scmp.eq.s32.totalorder %s15, 0
    %p99 = por %p97, %p98
    %p100 = scmp.ne.s32.totalorder %s88, %s89
    %p101 = scmp.eq.s32.totalorder %s16, 1
    %p102 = por %p100, %p101
    %p104 = scmp.ne.s32.totalorder %s89, %s103
    %p105 = scmp.eq.s32.totalorder %s16, 0
    %p106 = por %p104, %p105
    %s107 = ssub.s32 %s10, %s17
    %p108 = scmp.eq.s32.totalorder %s107, 0
    %s110 = sadd.s32 %s109, 1
    %s111 = scalar_select %p108, %s109, %s110
    %p114 = pneg %p108
    %p115 = scmp.eq.s32.totalorder %s10, 1
    %p116 = por %p114, %p115
    %p117 = scmp.ne.s32.totalorder %s109, %s112
    %p118 = scmp.eq.s32.totalorder %s10, 0
    %p119 = por %p117, %p118
    %p120 = scmp.ne.s32.totalorder %s109, %s112
    %p121 = scmp.eq.s32.totalorder %s15, 1
    %p122 = por %p120, %p121
    %p123 = scmp.ne.s32.totalorder %s112, %s113
    %p124 = scmp.eq.s32.totalorder %s15, 0
    %p125 = por %p123, %p124
    %p126 = scmp.ne.s32.totalorder %s112, %s113
    %p127 = scmp.eq.s32.totalorder %s16, 1
    %p128 = por %p126, %p127
    %p130 = scmp.ne.s32.totalorder %s113, %s129
    %p131 = scmp.eq.s32.totalorder %s16, 0
    %p132 = por %p130, %p131
    %p133 = scmp.le.s32.totalorder 1, %s10
    %p134 = scmp.lt.s32.totalorder %s10, 3
    %p135 = pnand %p133, %p134
    %p136 = pneg %p135
    // Predicated region
    $region9: #{edge_encoder_forward.1} parent=5 // pred_check
      _
    $region10: #{edge_encoder_forward.1} parent=5 // pred_check_branch
      %138 = sbr.rel (%p135) target = $region12
    $region11: #{edge_encoder_forward.1} parent=5 // pred_region
      %s139 = ssub.s32 %s10, 1
      // Predicated region
      $region13: #{edge_encoder_forward.1} parent=11 // pred_check
        %p140 = pneg %p57
      $region14: #{edge_encoder_forward.1} parent=11 // pred_check_branch
        %142 = sbr.rel (%p140) target = $region16
      $region15: #{edge_encoder_forward.1} parent=11 // pred_region
        _
      $region16: #{edge_encoder_forward.1} parent=11 // pred_fallthru
        _
      // Predicated region
      $region17: #{edge_encoder_forward.1} parent=11 // pred_check
        %p143 = pneg %p78
      $region18: #{edge_encoder_forward.1} parent=11 // pred_check_branch
        %145 = sbr.rel (%p143) target = $region20
      $region19: #{edge_encoder_forward.1} parent=11 // pred_region
        _
      $region20: #{edge_encoder_forward.1} parent=11 // pred_fallthru
        _
      // Predicated region
      $region21: #{edge_encoder_forward.1} parent=11 // pred_check
        %p146 = pneg %p99
      $region22: #{edge_encoder_forward.1} parent=11 // pred_check_branch
        %148 = sbr.rel (%p146) target = $region24
      $region23: #{edge_encoder_forward.1} parent=11 // pred_region
        _
      $region24: #{edge_encoder_forward.1} parent=11 // pred_fallthru
        _
    $region12: #{edge_encoder_forward.1} parent=5 // pred_fallthru
      _
    %p149 = scmp.lt.s32.totalorder %s10, 2
    // Predicated region
    $region25: #{edge_encoder_forward.1} parent=5 // pred_check
      %p150 = pneg %p149
    $region26: #{edge_encoder_forward.1} parent=5 // pred_check_branch
      %152 = sbr.rel (%p150) target = $region28
    $region27: #{edge_encoder_forward.1} parent=5 // pred_region
      // Predicated region
      $region29: #{edge_encoder_forward.1} parent=27 // pred_check
        %p153 = pneg %p30
      $region30: #{edge_encoder_forward.1} parent=27 // pred_check_branch
        %155 = sbr.rel (%p153) target = $region32
      $region31: #{edge_encoder_forward.1} parent=27 // pred_region
        %p156 = scmp.lt.s32.totalorder %s10, 1
        %s157 = scalar_select %p156, %s10, 1
        %s158 = smul.addr %s157, 2
        %s159 = smul.addr %s158, 8
        %s160 = scalar_lea.vmem %s0, %s159
      $region32: #{edge_encoder_forward.1} parent=27 // pred_fallthru
        _
    $region28: #{edge_encoder_forward.1} parent=5 // pred_fallthru
      _
    %p161 = scmp.le.s32.totalorder 1, %s10
    %p162 = scmp.lt.s32.totalorder %s10, 3
    %p163 = pnand %p161, %p162
    %p164 = pneg %p163
    // Predicated region
    $region33: #{edge_encoder_forward.1} parent=5 // pred_check
      _
    $region34: #{edge_encoder_forward.1} parent=5 // pred_check_branch
      %166 = sbr.rel (%p163) target = $region36
    $region35: #{edge_encoder_forward.1} parent=5 // pred_region
      %s167 = ssub.s32 %s10, 1
      %p168 = scmp.lt.s32.totalorder %s15, 1
      %s169 = scalar_select %p168, %s15, 1
      %s170 = smul.addr %s169, 2
      %s171 = smul.addr %s170, 8
      %s172 = scalar_lea.vmem %s0, %s171
      %p173 = pneg %p36
      %p174 = pneg %p33
      %p175 = pneg %p57
      %p176 = pneg %p54
      %p177 = pneg %p78
      %p178 = pneg %p75
      %p179 = pneg %p99
      %p180 = pneg %p96
      %p181 = pneg %p125
      %p182 = pneg %p122
      %p183 = scmp.lt.s32.totalorder %s15, 1
      %s184 = scalar_select %p183, %s15, 1
      %s185 = smul.addr %s184, 8
      %s186 = smul.addr %s185, 8
      %s187 = scalar_lea.vmem %s4, %s186
      %p188 = scmp.lt.s32.totalorder %s15, 1
      %s189 = scalar_select %p188, %s15, 1
      %s190 = smul.addr %s189, 2
      %s191 = smul.addr %s190, 8
      %s192 = scalar_lea.vmem %s0, %s191
      %p193 = scmp.lt.s32.totalorder %s15, 1
      %s194 = scalar_select %p193, %s15, 1
      %s195 = smul.addr %s194, 8
      %s196 = smul.addr %s195, 8
      %s197 = scalar_lea.vmem %s4, %s196
      %v198 = vld [vmem:[%s3] sm:$0xf]
      %v199 = vld [vmem:[%s192] sm:$0xff]
      %v200 = vld [vmem:[%s192 + $0x8] sm:$0xff]
      %v202 = vperm.slane %v198, 0
      %v203 = vperm.slane %v198, 2
      %v206 = vperm.slane %v202, 0
      %v207 = vperm.slane %v203, 0
      %210 = vrot.lane.b32.xlu0 %v206, 111
      %v211 = vpop.permute.xlu0 %210
      %212 = vrot.lane.b32.xlu0 %v207, 111
      %v213 = vpop.permute.xlu0 %212
      %vm214 = vcmask 908288
      %v215 = vsel %vm214, %v211, %v213
      %v219 = vmul.f32 %v211, 0.0
      %v220 = vmul.f32 %v199, %v215
      %v221 = vmul.f32 %v200, %v213
      %v222 = vperm.slane %v198, 1
      %v223 = vperm.slane %v198, 3
      %v226 = vperm.slane %v222, 1
      %v227 = vperm.slane %v223, 1
      %230 = vrot.lane.b32.xlu0 %v226, 113
      %v231 = vpop.permute.xlu0 %230
      %232 = vrot.lane.b32.xlu0 %v227, 113
      %v233 = vpop.permute.xlu0 %232
      %vm234 = vcmask 924672
      %v235 = vsel %vm234, %v231, %v233
      %v239 = vmul.f32 %v231, 0.0
      %v240 = vmul.f32 %v199, %v235
      %v241 = vmul.f32 %v200, %v233
      %242 = vrot.lane.b32.xlu0 %v206, 127
      %v243 = vpop.permute.xlu0 %242
      %244 = vrot.lane.b32.xlu0 %v207, 127
      %v245 = vpop.permute.xlu0 %244
      %vm246 = vcmask 1039360
      %v247 = vsel %vm246, %v243, %v245
      %v251 = vmul.f32 %v243, 0.0
      %v252 = vmul.f32 %v199, %v247
      %v253 = vmul.f32 %v200, %v245
      %254 = vrot.lane.b32.xlu0 %v226, 1
      %v255 = vpop.permute.xlu0 %254
      %256 = vrot.lane.b32.xlu0 %v227, 1
      %v257 = vpop.permute.xlu0 %256
      %vm258 = vcmask 7168
      %v259 = vsel %vm258, %v255, %v257
      %v263 = vmul.f32 %v199, %v255
      %v264 = vmul.f32 %v200, %v259
      %v265 = vmul.f32 %v257, 0.0
      %266 = vrot.lane.b32.xlu0 %v206, 15
      %v267 = vpop.permute.xlu0 %266
      %268 = vrot.lane.b32.xlu0 %v207, 15
      %v269 = vpop.permute.xlu0 %268
      %vm270 = vcmask 121856
      %v271 = vsel %vm270, %v267, %v269
      %v275 = vmul.f32 %v199, %v267
      %v276 = vmul.f32 %v200, %v271
      %v277 = vmul.f32 %v269, 0.0
      %278 = vrot.lane.b32.xlu0 %v226, 17
      %v279 = vpop.permute.xlu0 %278
      %280 = vrot.lane.b32.xlu0 %v227, 17
      %v281 = vpop.permute.xlu0 %280
      %vm282 = vcmask 138240
      %v283 = vsel %vm282, %v279, %v281
      %v287 = vmul.f32 %v199, %v279
      %v288 = vmul.f32 %v200, %v283
      %v289 = vmul.f32 %v281, 0.0
      %293 = vrot.lane.b32.xlu0 0.0, 127
      %v294 = vpop.permute.xlu0 %293
      %295 = vrot.lane.b32.xlu0 %v199, 127
      %v296 = vpop.permute.xlu0 %295
      %297 = vrot.lane.b32.xlu0 %v200, 127
      %v298 = vpop.permute.xlu0 %297
      %v299 = vsel %vm246, %v294, %v296
      %v300 = vsel %vm246, %v296, %v298
      %304 = vrot.lane.b32.xlu0 %v239, 126
      %v305 = vpop.permute.xlu0 %304
      %306 = vrot.lane.b32.xlu0 %v240, 126
      %v307 = vpop.permute.xlu0 %306
      %308 = vrot.lane.b32.xlu0 %v241, 126
      %v309 = vpop.permute.xlu0 %308
      %vm310 = vcmask 1031168
      %v311 = vsel %vm310, %v305, %v307
      %v312 = vsel %vm310, %v307, %v309
      %316 = vrot.lane.b32.xlu0 %v251, 112
      %v317 = vpop.permute.xlu0 %316
      %318 = vrot.lane.b32.xlu0 %v252, 112
      %v319 = vpop.permute.xlu0 %318
      %320 = vrot.lane.b32.xlu0 %v253, 112
      %v321 = vpop.permute.xlu0 %320
      %vm322 = vcmask 916480
      %v323 = vsel %vm322, %v317, %v319
      %v324 = vsel %vm322, %v319, %v321
      %325 = vrot.lane.b32.xlu0 %v199, 111
      %v326 = vpop.permute.xlu0 %325
      %327 = vrot.lane.b32.xlu0 %v200, 111
      %v328 = vpop.permute.xlu0 %327
      %v329 = vsel %vm214, %v326, %v328
      %333 = vrot.lane.b32.xlu0 %v263, 110
      %v334 = vpop.permute.xlu0 %333
      %335 = vrot.lane.b32.xlu0 %v264, 110
      %v336 = vpop.permute.xlu0 %335
      %337 = vrot.lane.b32.xlu0 %v265, 110
      %v338 = vpop.permute.xlu0 %337
      %vm339 = vcmask 900096
      %v340 = vsel %vm339, %v334, %v336
      %v341 = vsel %vm339, %v336, %v338
      %345 = vrot.lane.b32.xlu0 %v275, 96
      %v346 = vpop.permute.xlu0 %345
      %347 = vrot.lane.b32.xlu0 %v276, 96
      %v348 = vpop.permute.xlu0 %347
      %349 = vrot.lane.b32.xlu0 %v277, 96
      %v350 = vpop.permute.xlu0 %349
      %vm351 = vcmask 785408
      %v352 = vsel %vm351, %v346, %v348
      %v353 = vsel %vm351, %v348, %v350
      %354 = vrot.lane.b32.xlu0 %v199, 95
      %v355 = vpop.permute.xlu0 %354
      %356 = vrot.lane.b32.xlu0 %v200, 95
      %v357 = vpop.permute.xlu0 %356
      %358 = vrot.lane.b32.xlu0 0.0, 95
      %v359 = vpop.permute.xlu0 %358
      %vm360 = vcmask 777216
      %v361 = vsel %vm360, %v355, %v357
      %v362 = vsel %vm360, %v357, %v359
      %366 = vrot.lane.b32.xlu0 %v287, 94
      %v367 = vpop.permute.xlu0 %366
      %368 = vrot.lane.b32.xlu0 %v288, 94
      %v369 = vpop.permute.xlu0 %368
      %370 = vrot.lane.b32.xlu0 %v289, 94
      %v371 = vpop.permute.xlu0 %370
      %vm372 = vcmask 769024
      %v373 = vsel %vm372, %v367, %v369
      %v374 = vsel %vm372, %v369, %v371
      %v375 = vld [vmem:[%s1] sm:$0xff]
      %v376 = vld [vmem:[%s1 + $0x8] sm:$0xff]
      %v377 = vld [vmem:[%s1 + $0x10] sm:$0xff]
      %381 = vrot.lane.b32.xlu0 %v219, 17
      %v382 = vpop.permute.xlu0 %381
      %383 = vrot.lane.b32.xlu0 %v220, 17
      %v384 = vpop.permute.xlu0 %383
      %385 = vrot.lane.b32.xlu0 %v221, 17
      %v386 = vpop.permute.xlu0 %385
      %387 = vrot.lane.b32.xlu0 %v299, 17
      %v388 = vpop.permute.xlu0 %387
      %389 = vrot.lane.b32.xlu0 %v300, 17
      %v390 = vpop.permute.xlu0 %389
      %391 = vrot.lane.b32.xlu0 %v298, 17
      %v392 = vpop.permute.xlu0 %391
      %393 = vrot.lane.b32.xlu0 %v311, 17
      %v394 = vpop.permute.xlu0 %393
      %395 = vrot.lane.b32.xlu0 %v312, 17
      %v396 = vpop.permute.xlu0 %395
      %397 = vrot.lane.b32.xlu0 %v309, 17
      %v398 = vpop.permute.xlu0 %397
      %399 = vrot.lane.b32.xlu0 %v323, 17
      %v400 = vpop.permute.xlu0 %399
      %401 = vrot.lane.b32.xlu0 %v324, 17
      %v402 = vpop.permute.xlu0 %401
      %403 = vrot.lane.b32.xlu0 %v321, 17
      %v404 = vpop.permute.xlu0 %403
      %405 = vrot.lane.b32.xlu0 %v326, 17
      %v406 = vpop.permute.xlu0 %405
      %407 = vrot.lane.b32.xlu0 %v329, 17
      %v408 = vpop.permute.xlu0 %407
      %409 = vrot.lane.b32.xlu0 %v328, 17
      %v410 = vpop.permute.xlu0 %409
      %411 = vrot.lane.b32.xlu0 %v334, 17
      %v412 = vpop.permute.xlu0 %411
      %413 = vrot.lane.b32.xlu0 %v340, 17
      %v414 = vpop.permute.xlu0 %413
      %415 = vrot.lane.b32.xlu0 %v341, 17
      %v416 = vpop.permute.xlu0 %415
      %417 = vrot.lane.b32.xlu0 %v346, 17
      %v418 = vpop.permute.xlu0 %417
      %419 = vrot.lane.b32.xlu0 %v352, 17
      %v420 = vpop.permute.xlu0 %419
      %421 = vrot.lane.b32.xlu0 %v353, 17
      %v422 = vpop.permute.xlu0 %421
      %423 = vrot.lane.b32.xlu0 %v355, 17
      %v424 = vpop.permute.xlu0 %423
      %425 = vrot.lane.b32.xlu0 %v361, 17
      %v426 = vpop.permute.xlu0 %425
      %427 = vrot.lane.b32.xlu0 %v362, 17
      %v428 = vpop.permute.xlu0 %427
      %429 = vrot.lane.b32.xlu0 %v367, 17
      %v430 = vpop.permute.xlu0 %429
      %431 = vrot.lane.b32.xlu0 %v373, 17
      %v432 = vpop.permute.xlu0 %431
      %433 = vrot.lane.b32.xlu0 %v374, 17
      %v434 = vpop.permute.xlu0 %433
      %v435 = vsel %vm282, %v382, %v384
      %v436 = vsel %vm282, %v384, %v386
      %v437 = vsel %vm282, %v388, %v390
      %v438 = vsel %vm282, %v390, %v392
      %v439 = vsel %vm282, %v394, %v396
      %v440 = vsel %vm282, %v396, %v398
      %v441 = vsel %vm282, %v400, %v402
      %v442 = vsel %vm282, %v402, %v404
      %v443 = vsel %vm282, %v406, %v408
      %v444 = vsel %vm282, %v408, %v410
      %v445 = vsel %vm282, %v412, %v414
      %v446 = vsel %vm282, %v414, %v416
      %v447 = vsel %vm282, %v418, %v420
      %v448 = vsel %vm282, %v420, %v422
      %v449 = vsel %vm282, %v424, %v426
      %v450 = vsel %vm282, %v426, %v428
      %v451 = vsel %vm282, %v430, %v432
      %v452 = vsel %vm282, %v432, %v434
      %vm471 = vcmask 588800
      %v473 = vsel %vm471, %v375, 0
      %v476 = vsel %vm471, %v376, 0
      %v479 = vsel %vm471, %v377, 0
      %481 = vmatpush.msra.mxu0 0.0
      %482 = vmatpush.msra.mxu0 0.0
      %483 = vmatpush.msra.mxu0 0.0
      %484 = vmatpush.msra.mxu0 0.0
      %485 = vmatpush.msra.mxu0 0.0
      %486 = vmatpush.msra.mxu0 0.0
      %487 = vmatpush.msra.mxu0 0.0
      %488 = vmatpush.msra.mxu0 %v451
      %489 = vmatpush.msra.mxu0 %v449
      %490 = vmatpush.msra.mxu0 %v447
      %491 = vmatpush.msra.mxu0 %v445
      %492 = vmatpush.msra.mxu0 %v443
      %493 = vmatpush.msra.mxu0 %v441
      %494 = vmatpush.msra.mxu0 %v439
      %495 = vmatpush.msra.mxu0 %v437
      %496 = vmatpush.msra.mxu0 %v435
      %497 = vmatmul.f32.gmra.mxu0 %v473
      %v498 = vpop.f32.mrf.mxu0
      %v499 = vadd.f32 0.0, %v498
      %500 = vmatmul.f32.gmra.mxu0 %v476
      %v501 = vpop.f32.mrf.mxu0
      %v502 = vadd.f32 0.0, %v501
      %503 = vmatmul.f32.gmra.mxu0 %v479
      %v504 = vpop.f32.mrf.mxu0
      %v505 = vadd.f32 0.0, %v504
      %506 = vdwg.mxu0
      %507 = vmatpush.msra.mxu0 0.0
      %508 = vmatpush.msra.mxu0 0.0
      %509 = vmatpush.msra.mxu0 0.0
      %510 = vmatpush.msra.mxu0 0.0
      %511 = vmatpush.msra.mxu0 0.0
      %512 = vmatpush.msra.mxu0 0.0
      %513 = vmatpush.msra.mxu0 0.0
      %514 = vmatpush.msra.mxu0 %v452
      %515 = vmatpush.msra.mxu0 %v450
      %516 = vmatpush.msra.mxu0 %v448
      %517 = vmatpush.msra.mxu0 %v446
      %518 = vmatpush.msra.mxu0 %v444
      %519 = vmatpush.msra.mxu0 %v442
      %520 = vmatpush.msra.mxu0 %v440
      %521 = vmatpush.msra.mxu0 %v438
      %522 = vmatpush.msra.mxu0 %v436
      %523 = vmatmul.f32.gmra.mxu0 %v473
      %v524 = vpop.f32.mrf.mxu0
      %v525 = vadd.f32 0.0, %v524
      %526 = vmatmul.f32.gmra.mxu0 %v476
      %v527 = vpop.f32.mrf.mxu0
      %v528 = vadd.f32 0.0, %v527
      %529 = vmatmul.f32.gmra.mxu0 %v479
      %v530 = vpop.f32.mrf.mxu0
      %v531 = vadd.f32 0.0, %v530
      %532 = vdwg.mxu0
      %v533 = vxor.u32 %v499, 2147483648
      %v534 = vxor.u32 %v525, 2147483648
      %v535 = vxor.u32 %v502, 2147483648
      %v536 = vxor.u32 %v528, 2147483648
      %v537 = vxor.u32 %v505, 2147483648
      %v538 = vxor.u32 %v531, 2147483648
      %v539 = vmul.f32 %v533, 1.442695
      %v540 = vpow.pop %v539
      %v541 = vmul.f32 %v534, 1.442695
      %v542 = vpow.pop %v541
      %v543 = vmul.f32 %v535, 1.442695
      %v544 = vpow.pop %v543
      %v545 = vmul.f32 %v536, 1.442695
      %v546 = vpow.pop %v545
      %v547 = vmul.f32 %v537, 1.442695
      %v548 = vpow.pop %v547
      %v549 = vmul.f32 %v538, 1.442695
      %v550 = vpow.pop %v549
      %v551 = vadd.f32 %v540, 1.0
      %v552 = vadd.f32 %v542, 1.0
      %v553 = vadd.f32 %v544, 1.0
      %v554 = vadd.f32 %v546, 1.0
      %v555 = vadd.f32 %v548, 1.0
      %v556 = vadd.f32 %v550, 1.0
      %v557 = vrcp.pop %v551
      %v558 = vmul.f32 %v551, %v557
      %v559 = vsub.f32 1.0, %v558
      %v560 = vmul.f32 %v557, %v559
      %v561 = vadd.f32 %v557, %v560
      %vm562 = vweird.f32 %v551
      %vm563 = vweird.f32 %v557
      %vm564 = vmor %vm562, %vm563
      %v565 = vsel %vm564, %v557, %v561
      %v566 = vand.u32 2147483647, %v551
      %vm567 = vcmp.eq.f32.partialorder %v566, 8.507059e+37
      %v568 = vand.u32 %v551, 2147483648
      %v569 = vor.u32 1.1754944e-38, %v568
      %v570 = vsel %vm567, %v569, %v565
      %v571 = vmul.f32 1.0, %v570
      %v572 = vrcp.pop %v552
      %v573 = vmul.f32 %v552, %v572
      %v574 = vsub.f32 1.0, %v573
      %v575 = vmul.f32 %v572, %v574
      %v576 = vadd.f32 %v572, %v575
      %vm577 = vweird.f32 %v552
      %vm578 = vweird.f32 %v572
      %vm579 = vmor %vm577, %vm578
      %v580 = vsel %vm579, %v572, %v576
      %v581 = vand.u32 2147483647, %v552
      %vm582 = vcmp.eq.f32.partialorder %v581, 8.507059e+37
      %v583 = vand.u32 %v552, 2147483648
      %v584 = vor.u32 1.1754944e-38, %v583
      %v585 = vsel %vm582, %v584, %v580
      %v586 = vmul.f32 1.0, %v585
      %v587 = vrcp.pop %v553
      %v588 = vmul.f32 %v553, %v587
      %v589 = vsub.f32 1.0, %v588
      %v590 = vmul.f32 %v587, %v589
      %v591 = vadd.f32 %v587, %v590
      %vm592 = vweird.f32 %v553
      %vm593 = vweird.f32 %v587
      %vm594 = vmor %vm592, %vm593
      %v595 = vsel %vm594, %v587, %v591
      %v596 = vand.u32 2147483647, %v553
      %vm597 = vcmp.eq.f32.partialorder %v596, 8.507059e+37
      %v598 = vand.u32 %v553, 2147483648
      %v599 = vor.u32 1.1754944e-38, %v598
      %v600 = vsel %vm597, %v599, %v595
      %v601 = vmul.f32 1.0, %v600
      %v602 = vrcp.pop %v554
      %v603 = vmul.f32 %v554, %v602
      %v604 = vsub.f32 1.0, %v603
      %v605 = vmul.f32 %v602, %v604
      %v606 = vadd.f32 %v602, %v605
      %vm607 = vweird.f32 %v554
      %vm608 = vweird.f32 %v602
      %vm609 = vmor %vm607, %vm608
      %v610 = vsel %vm609, %v602, %v606
      %v611 = vand.u32 2147483647, %v554
      %vm612 = vcmp.eq.f32.partialorder %v611, 8.507059e+37
      %v613 = vand.u32 %v554, 2147483648
      %v614 = vor.u32 1.1754944e-38, %v613
      %v615 = vsel %vm612, %v614, %v610
      %v616 = vmul.f32 1.0, %v615
      %v617 = vrcp.pop %v555
      %v618 = vmul.f32 %v555, %v617
      %v619 = vsub.f32 1.0, %v618
      %v620 = vmul.f32 %v617, %v619
      %v621 = vadd.f32 %v617, %v620
      %vm622 = vweird.f32 %v555
      %vm623 = vweird.f32 %v617
      %vm624 = vmor %vm622, %vm623
      %v625 = vsel %vm624, %v617, %v621
      %v626 = vand.u32 2147483647, %v555
      %vm627 = vcmp.eq.f32.partialorder %v626, 8.507059e+37
      %v628 = vand.u32 %v555, 2147483648
      %v629 = vor.u32 1.1754944e-38, %v628
      %v630 = vsel %vm627, %v629, %v625
      %v631 = vmul.f32 1.0, %v630
      %v632 = vrcp.pop %v556
      %v633 = vmul.f32 %v556, %v632
      %v634 = vsub.f32 1.0, %v633
      %v635 = vmul.f32 %v632, %v634
      %v636 = vadd.f32 %v632, %v635
      %vm637 = vweird.f32 %v556
      %vm638 = vweird.f32 %v632
      %vm639 = vmor %vm637, %vm638
      %v640 = vsel %vm639, %v632, %v636
      %v641 = vand.u32 2147483647, %v556
      %vm642 = vcmp.eq.f32.partialorder %v641, 8.507059e+37
      %v643 = vand.u32 %v556, 2147483648
      %v644 = vor.u32 1.1754944e-38, %v643
      %v645 = vsel %vm642, %v644, %v640
      %v646 = vmul.f32 1.0, %v645
      %v647 = vmul.f32 %v499, %v571
      %v648 = vmul.f32 %v525, %v586
      %v649 = vmul.f32 %v502, %v601
      %v650 = vmul.f32 %v528, %v616
      %v651 = vmul.f32 %v505, %v631
      %v652 = vmul.f32 %v531, %v646
      %v653 = vmul.f32 %v647, %v215
      %v654 = vmul.f32 %v648, %v213
      %v655 = vmul.f32 %v649, %v215
      %v656 = vmul.f32 %v650, %v213
      %v657 = vmul.f32 %v651, %v215
      %v658 = vmul.f32 %v652, %v213
      %v659 = vmul.f32 %v647, %v235
      %v660 = vmul.f32 %v648, %v233
      %v661 = vmul.f32 %v649, %v235
      %v662 = vmul.f32 %v650, %v233
      %v663 = vmul.f32 %v651, %v235
      %v664 = vmul.f32 %v652, %v233
      %v665 = vmul.f32 %v647, %v247
      %v666 = vmul.f32 %v648, %v245
      %v667 = vmul.f32 %v649, %v247
      %v668 = vmul.f32 %v650, %v245
      %v669 = vmul.f32 %v651, %v247
      %v670 = vmul.f32 %v652, %v245
      %v671 = vmul.f32 %v647, %v255
      %v672 = vmul.f32 %v648, %v259
      %v673 = vmul.f32 %v649, %v255
      %v674 = vmul.f32 %v650, %v259
      %v675 = vmul.f32 %v651, %v255
      %v676 = vmul.f32 %v652, %v259
      %v677 = vmul.f32 %v647, %v267
      %v678 = vmul.f32 %v648, %v271
      %v679 = vmul.f32 %v649, %v267
      %v680 = vmul.f32 %v650, %v271
      %v681 = vmul.f32 %v651, %v267
      %v682 = vmul.f32 %v652, %v271
      %v683 = vmul.f32 %v647, %v279
      %v684 = vmul.f32 %v648, %v283
      %v685 = vmul.f32 %v649, %v279
      %v686 = vmul.f32 %v650, %v283
      %v687 = vmul.f32 %v651, %v279
      %v688 = vmul.f32 %v652, %v283
      %695 = vrot.lane.b32.xlu0 %v653, 17
      %v696 = vpop.permute.xlu0 %695
      %697 = vrot.lane.b32.xlu0 %v654, 17
      %v698 = vpop.permute.xlu0 %697
      %699 = vrot.lane.b32.xlu0 %v655, 17
      %v700 = vpop.permute.xlu0 %699
      %701 = vrot.lane.b32.xlu0 %v656, 17
      %v702 = vpop.permute.xlu0 %701
      %703 = vrot.lane.b32.xlu0 %v657, 17
      %v704 = vpop.permute.xlu0 %703
      %705 = vrot.lane.b32.xlu0 %v658, 17
      %v706 = vpop.permute.xlu0 %705
      %v707 = vsel %vm282, %v382, %v696
      %v708 = vsel %vm282, %v696, %v698
      %v709 = vsel %vm282, %v382, %v700
      %v710 = vsel %vm282, %v700, %v702
      %v711 = vsel %vm282, %v382, %v704
      %v712 = vsel %vm282, %v704, %v706
      %719 = vst [vmem:[#allocation2] sm:$0xff] %v707
      %720 = vst [vmem:[#allocation2 + $0x8] sm:$0xff] %v708
      %721 = vst [vmem:[#allocation2 + $0x10] sm:$0xff] %v709
      %722 = vst [vmem:[#allocation2 + $0x18] sm:$0xff] %v710
      %723 = vst [vmem:[#allocation2 + $0x20] sm:$0xff] %v711
      %724 = vst [vmem:[#allocation2 + $0x28] sm:$0xff] %v712
      %731 = vrot.lane.b32.xlu0 0.0, 16
      %v732 = vpop.permute.xlu0 %731
      %733 = vrot.lane.b32.xlu0 %v647, 16
      %v734 = vpop.permute.xlu0 %733
      %735 = vrot.lane.b32.xlu0 %v648, 16
      %v736 = vpop.permute.xlu0 %735
      %737 = vrot.lane.b32.xlu0 %v649, 16
      %v738 = vpop.permute.xlu0 %737
      %739 = vrot.lane.b32.xlu0 %v650, 16
      %v740 = vpop.permute.xlu0 %739
      %741 = vrot.lane.b32.xlu0 %v651, 16
      %v742 = vpop.permute.xlu0 %741
      %743 = vrot.lane.b32.xlu0 %v652, 16
      %v744 = vpop.permute.xlu0 %743
      %vm745 = vcmask 130048
      %v746 = vsel %vm745, %v732, %v734
      %v747 = vsel %vm745, %v734, %v736
      %v748 = vsel %vm745, %v732, %v738
      %v749 = vsel %vm745, %v738, %v740
      %v750 = vsel %vm745, %v732, %v742
      %v751 = vsel %vm745, %v742, %v744
      %758 = vst [vmem:[#allocation2 + $0x30] sm:$0xff] %v746
      %759 = vst [vmem:[#allocation2 + $0x38] sm:$0xff] %v747
      %760 = vst [vmem:[#allocation2 + $0x40] sm:$0xff] %v748
      %761 = vst [vmem:[#allocation2 + $0x48] sm:$0xff] %v749
      %762 = vst [vmem:[#allocation2 + $0x50] sm:$0xff] %v750
      %763 = vst [vmem:[#allocation2 + $0x58] sm:$0xff] %v751
      %770 = vrot.lane.b32.xlu0 %v239, 15
      %v771 = vpop.permute.xlu0 %770
      %772 = vrot.lane.b32.xlu0 %v659, 15
      %v773 = vpop.permute.xlu0 %772
      %774 = vrot.lane.b32.xlu0 %v660, 15
      %v775 = vpop.permute.xlu0 %774
      %776 = vrot.lane.b32.xlu0 %v661, 15
      %v777 = vpop.permute.xlu0 %776
      %778 = vrot.lane.b32.xlu0 %v662, 15
      %v779 = vpop.permute.xlu0 %778
      %780 = vrot.lane.b32.xlu0 %v663, 15
      %v781 = vpop.permute.xlu0 %780
      %782 = vrot.lane.b32.xlu0 %v664, 15
      %v783 = vpop.permute.xlu0 %782
      %v784 = vsel %vm270, %v771, %v773
      %v785 = vsel %vm270, %v773, %v775
      %v786 = vsel %vm270, %v771, %v777
      %v787 = vsel %vm270, %v777, %v779
      %v788 = vsel %vm270, %v771, %v781
      %v789 = vsel %vm270, %v781, %v783
      %796 = vst [vmem:[#allocation2 + $0x60] sm:$0xff] %v784
      %797 = vst [vmem:[#allocation2 + $0x68] sm:$0xff] %v785
      %798 = vst [vmem:[#allocation2 + $0x70] sm:$0xff] %v786
      %799 = vst [vmem:[#allocation2 + $0x78] sm:$0xff] %v787
      %800 = vst [vmem:[#allocation2 + $0x80] sm:$0xff] %v788
      %801 = vst [vmem:[#allocation2 + $0x88] sm:$0xff] %v789
      %808 = vrot.lane.b32.xlu0 %v251, 1
      %v809 = vpop.permute.xlu0 %808
      %810 = vrot.lane.b32.xlu0 %v665, 1
      %v811 = vpop.permute.xlu0 %810
      %812 = vrot.lane.b32.xlu0 %v666, 1
      %v813 = vpop.permute.xlu0 %812
      %814 = vrot.lane.b32.xlu0 %v667, 1
      %v815 = vpop.permute.xlu0 %814
      %816 = vrot.lane.b32.xlu0 %v668, 1
      %v817 = vpop.permute.xlu0 %816
      %818 = vrot.lane.b32.xlu0 %v669, 1
      %v819 = vpop.permute.xlu0 %818
      %820 = vrot.lane.b32.xlu0 %v670, 1
      %v821 = vpop.permute.xlu0 %820
      %v822 = vsel %vm258, %v809, %v811
      %v823 = vsel %vm258, %v811, %v813
      %v824 = vsel %vm258, %v809, %v815
      %v825 = vsel %vm258, %v815, %v817
      %v826 = vsel %vm258, %v809, %v819
      %v827 = vsel %vm258, %v819, %v821
      %834 = vst [vmem:[#allocation2 + $0x90] sm:$0xff] %v822
      %835 = vst [vmem:[#allocation2 + $0x98] sm:$0xff] %v823
      %836 = vst [vmem:[#allocation2 + $0xa0] sm:$0xff] %v824
      %837 = vst [vmem:[#allocation2 + $0xa8] sm:$0xff] %v825
      %838 = vst [vmem:[#allocation2 + $0xb0] sm:$0xff] %v826
      %839 = vst [vmem:[#allocation2 + $0xb8] sm:$0xff] %v827
      %840 = vst [vmem:[#allocation2 + $0xc0] sm:$0xff] %v647
      %841 = vst [vmem:[#allocation2 + $0xc8] sm:$0xff] %v648
      %842 = vst [vmem:[#allocation2 + $0xd0] sm:$0xff] %v649
      %843 = vst [vmem:[#allocation2 + $0xd8] sm:$0xff] %v650
      %844 = vst [vmem:[#allocation2 + $0xe0] sm:$0xff] %v651
      %845 = vst [vmem:[#allocation2 + $0xe8] sm:$0xff] %v652
      %852 = vrot.lane.b32.xlu0 %v671, 127
      %v853 = vpop.permute.xlu0 %852
      %854 = vrot.lane.b32.xlu0 %v672, 127
      %v855 = vpop.permute.xlu0 %854
      %856 = vrot.lane.b32.xlu0 %v265, 127
      %v857 = vpop.permute.xlu0 %856
      %858 = vrot.lane.b32.xlu0 %v673, 127
      %v859 = vpop.permute.xlu0 %858
      %860 = vrot.lane.b32.xlu0 %v674, 127
      %v861 = vpop.permute.xlu0 %860
      %862 = vrot.lane.b32.xlu0 %v675, 127
      %v863 = vpop.permute.xlu0 %862
      %864 = vrot.lane.b32.xlu0 %v676, 127
      %v865 = vpop.permute.xlu0 %864
      %v866 = vsel %vm246, %v853, %v855
      %v867 = vsel %vm246, %v855, %v857
      %v868 = vsel %vm246, %v859, %v861
      %v869 = vsel %vm246, %v861, %v857
      %v870 = vsel %vm246, %v863, %v865
      %v871 = vsel %vm246, %v865, %v857
      %878 = vst [vmem:[#allocation2 + $0xf0] sm:$0xff] %v866
      %879 = vst [vmem:[#allocation2 + $0xf8] sm:$0xff] %v867
      %880 = vst [vmem:[#allocation2 + $0x100] sm:$0xff] %v868
      %881 = vst [vmem:[#allocation2 + $0x108] sm:$0xff] %v869
      %882 = vst [vmem:[#allocation2 + $0x110] sm:$0xff] %v870
      %883 = vst [vmem:[#allocation2 + $0x118] sm:$0xff] %v871
      %890 = vrot.lane.b32.xlu0 %v677, 113
      %v891 = vpop.permute.xlu0 %890
      %892 = vrot.lane.b32.xlu0 %v678, 113
      %v893 = vpop.permute.xlu0 %892
      %894 = vrot.lane.b32.xlu0 %v277, 113
      %v895 = vpop.permute.xlu0 %894
      %896 = vrot.lane.b32.xlu0 %v679, 113
      %v897 = vpop.permute.xlu0 %896
      %898 = vrot.lane.b32.xlu0 %v680, 113
      %v899 = vpop.permute.xlu0 %898
      %900 = vrot.lane.b32.xlu0 %v681, 113
      %v901 = vpop.permute.xlu0 %900
      %902 = vrot.lane.b32.xlu0 %v682, 113
      %v903 = vpop.permute.xlu0 %902
      %v904 = vsel %vm234, %v891, %v893
      %v905 = vsel %vm234, %v893, %v895
      %v906 = vsel %vm234, %v897, %v899
      %v907 = vsel %vm234, %v899, %v895
      %v908 = vsel %vm234, %v901, %v903
      %v909 = vsel %vm234, %v903, %v895
      %916 = vst [vmem:[#allocation2 + $0x120] sm:$0xff] %v904
      %917 = vst [vmem:[#allocation2 + $0x128] sm:$0xff] %v905
      %918 = vst [vmem:[#allocation2 + $0x130] sm:$0xff] %v906
      %919 = vst [vmem:[#allocation2 + $0x138] sm:$0xff] %v907
      %920 = vst [vmem:[#allocation2 + $0x140] sm:$0xff] %v908
      %921 = vst [vmem:[#allocation2 + $0x148] sm:$0xff] %v909
      %922 = vrot.lane.b32.xlu0 %v647, 112
      %v923 = vpop.permute.xlu0 %922
      %924 = vrot.lane.b32.xlu0 %v648, 112
      %v925 = vpop.permute.xlu0 %924
      %926 = vrot.lane.b32.xlu0 0.0, 112
      %v927 = vpop.permute.xlu0 %926
      %928 = vrot.lane.b32.xlu0 %v649, 112
      %v929 = vpop.permute.xlu0 %928
      %930 = vrot.lane.b32.xlu0 %v650, 112
      %v931 = vpop.permute.xlu0 %930
      %932 = vrot.lane.b32.xlu0 %v651, 112
      %v933 = vpop.permute.xlu0 %932
      %934 = vrot.lane.b32.xlu0 %v652, 112
      %v935 = vpop.permute.xlu0 %934
      %v936 = vsel %vm322, %v923, %v925
      %v937 = vsel %vm322, %v925, %v927
      %v938 = vsel %vm322, %v929, %v931
      %v939 = vsel %vm322, %v931, %v927
      %v940 = vsel %vm322, %v933, %v935
      %v941 = vsel %vm322, %v935, %v927
      %948 = vst [vmem:[#allocation2 + $0x150] sm:$0xff] %v936
      %949 = vst [vmem:[#allocation2 + $0x158] sm:$0xff] %v937
      %950 = vst [vmem:[#allocation2 + $0x160] sm:$0xff] %v938
      %951 = vst [vmem:[#allocation2 + $0x168] sm:$0xff] %v939
      %952 = vst [vmem:[#allocation2 + $0x170] sm:$0xff] %v940
      %953 = vst [vmem:[#allocation2 + $0x178] sm:$0xff] %v941
      %960 = vrot.lane.b32.xlu0 %v683, 111
      %v961 = vpop.permute.xlu0 %960
      %962 = vrot.lane.b32.xlu0 %v684, 111
      %v963 = vpop.permute.xlu0 %962
      %964 = vrot.lane.b32.xlu0 %v289, 111
      %v965 = vpop.permute.xlu0 %964
      %966 = vrot.lane.b32.xlu0 %v685, 111
      %v967 = vpop.permute.xlu0 %966
      %968 = vrot.lane.b32.xlu0 %v686, 111
      %v969 = vpop.permute.xlu0 %968
      %970 = vrot.lane.b32.xlu0 %v687, 111
      %v971 = vpop.permute.xlu0 %970
      %972 = vrot.lane.b32.xlu0 %v688, 111
      %v973 = vpop.permute.xlu0 %972
      %v974 = vsel %vm214, %v961, %v963
      %v975 = vsel %vm214, %v963, %v965
      %v976 = vsel %vm214, %v967, %v969
      %v977 = vsel %vm214, %v969, %v965
      %v978 = vsel %vm214, %v971, %v973
      %v979 = vsel %vm214, %v973, %v965
      %986 = vst [vmem:[#allocation2 + $0x180] sm:$0xff] %v974
      %987 = vst [vmem:[#allocation2 + $0x188] sm:$0xff] %v975
      %988 = vst [vmem:[#allocation2 + $0x190] sm:$0xff] %v976
      %989 = vst [vmem:[#allocation2 + $0x198] sm:$0xff] %v977
      %990 = vst [vmem:[#allocation2 + $0x1a0] sm:$0xff] %v978
      %991 = vst [vmem:[#allocation2 + $0x1a8] sm:$0xff] %v979
      %v992 = vld [vmem:[%s2] sm:$0xff]
      %v993 = vld [vmem:[%s2 + $0x8] sm:$0xff]
      %v994 = vld [vmem:[%s2 + $0x10] sm:$0x7]
      %v995 = vld [vmem:[%s2 + $0x18] sm:$0x7]
      %v996 = vld [vmem:[#allocation2] sm:$0xff]
      %v997 = vld [vmem:[#allocation2 + $0x8] sm:$0xff]
      %v998 = vld [vmem:[#allocation2 + $0x10] sm:$0xff]
      %v999 = vld [vmem:[#allocation2 + $0x18] sm:$0xff]
      %v1000 = vld [vmem:[#allocation2 + $0x20] sm:$0xff]
      %v1001 = vld [vmem:[#allocation2 + $0x28] sm:$0xff]
      %v1002 = vld [vmem:[#allocation2 + $0x30] sm:$0xff]
      %v1003 = vld [vmem:[#allocation2 + $0x38] sm:$0xff]
      %v1004 = vld [vmem:[#allocation2 + $0x40] sm:$0xff]
      %v1005 = vld [vmem:[#allocation2 + $0x48] sm:$0xff]
      %v1006 = vld [vmem:[#allocation2 + $0x50] sm:$0xff]
      %v1007 = vld [vmem:[#allocation2 + $0x58] sm:$0xff]
      %v1008 = vld [vmem:[#allocation2 + $0x60] sm:$0xff]
      %v1009 = vld [vmem:[#allocation2 + $0x68] sm:$0xff]
      %v1010 = vld [vmem:[#allocation2 + $0x70] sm:$0xff]
      %v1011 = vld [vmem:[#allocation2 + $0x78] sm:$0xff]
      %v1012 = vld [vmem:[#allocation2 + $0x80] sm:$0xff]
      %v1013 = vld [vmem:[#allocation2 + $0x88] sm:$0xff]
      %v1014 = vld [vmem:[#allocation2 + $0x90] sm:$0xff]
      %v1015 = vld [vmem:[#allocation2 + $0x98] sm:$0xff]
      %v1016 = vld [vmem:[#allocation2 + $0xa0] sm:$0xff]
      %v1017 = vld [vmem:[#allocation2 + $0xa8] sm:$0xff]
      %v1018 = vld [vmem:[#allocation2 + $0xb0] sm:$0xff]
      %v1019 = vld [vmem:[#allocation2 + $0xb8] sm:$0xff]
      %v1020 = vld [vmem:[#allocation2 + $0xc0] sm:$0xff]
      %v1021 = vld [vmem:[#allocation2 + $0xc8] sm:$0xff]
      %v1022 = vld [vmem:[#allocation2 + $0xd0] sm:$0xff]
      %v1023 = vld [vmem:[#allocation2 + $0xd8] sm:$0xff]
      %v1024 = vld [vmem:[#allocation2 + $0xe0] sm:$0xff]
      %v1025 = vld [vmem:[#allocation2 + $0xe8] sm:$0xff]
      %v1026 = vld [vmem:[#allocation2 + $0xf0] sm:$0xff]
      %v1027 = vld [vmem:[#allocation2 + $0xf8] sm:$0xff]
      %v1028 = vld [vmem:[#allocation2 + $0x100] sm:$0xff]
      %v1029 = vld [vmem:[#allocation2 + $0x108] sm:$0xff]
      %v1030 = vld [vmem:[#allocation2 + $0x110] sm:$0xff]
      %v1031 = vld [vmem:[#allocation2 + $0x118] sm:$0xff]
      %v1032 = vld [vmem:[#allocation2 + $0x120] sm:$0xff]
      %v1033 = vld [vmem:[#allocation2 + $0x128] sm:$0xff]
      %v1034 = vld [vmem:[#allocation2 + $0x130] sm:$0xff]
      %v1035 = vld [vmem:[#allocation2 + $0x138] sm:$0xff]
      %v1036 = vld [vmem:[#allocation2 + $0x140] sm:$0xff]
      %v1037 = vld [vmem:[#allocation2 + $0x148] sm:$0xff]
      %v1038 = vld [vmem:[#allocation2 + $0x150] sm:$0xff]
      %v1039 = vld [vmem:[#allocation2 + $0x158] sm:$0xff]
      %v1040 = vld [vmem:[#allocation2 + $0x160] sm:$0xff]
      %v1041 = vld [vmem:[#allocation2 + $0x168] sm:$0xff]
      %v1042 = vld [vmem:[#allocation2 + $0x170] sm:$0xff]
      %v1043 = vld [vmem:[#allocation2 + $0x178] sm:$0xff]
      %v1044 = vld [vmem:[#allocation2 + $0x180] sm:$0xff]
      %v1045 = vld [vmem:[#allocation2 + $0x188] sm:$0xff]
      %v1046 = vld [vmem:[#allocation2 + $0x190] sm:$0xff]
      %v1047 = vld [vmem:[#allocation2 + $0x198] sm:$0xff]
      %v1048 = vld [vmem:[#allocation2 + $0x1a0] sm:$0xff]
      %v1049 = vld [vmem:[#allocation2 + $0x1a8] sm:$0xff]
      %vm1050 = vcmask 719872
      %v1052 = vsel %vm1050, %v993, 0
      %v1055 = vsel %vm1050, %v995, 0
      %1057 = vmatpush.msra.mxu0 %v1026
      %1058 = vmatpush.msra.mxu0 %v1024
      %1059 = vmatpush.msra.mxu0 %v1022
      %1060 = vmatpush.msra.mxu0 %v1020
      %1061 = vmatpush.msra.mxu0 %v1018
      %1062 = vmatpush.msra.mxu0 %v1016
      %1063 = vmatpush.msra.mxu0 %v1014
      %1064 = vmatpush.msra.mxu0 %v1012
      %1065 = vmatpush.msra.mxu0 %v1010
      %1066 = vmatpush.msra.mxu0 %v1008
      %1067 = vmatpush.msra.mxu0 %v1006
      %1068 = vmatpush.msra.mxu0 %v1004
      %1069 = vmatpush.msra.mxu0 %v1002
      %1070 = vmatpush.msra.mxu0 %v1000
      %1071 = vmatpush.msra.mxu0 %v998
      %1072 = vmatpush.msra.mxu0 %v996
      %1073 = vmatmul.f32.gmra.mxu0 %v992
      %v1074 = vpop.f32.mrf.mxu0
      %v1075 = vadd.f32 0.0, %v1074
      %1076 = vmatmul.f32.gmra.mxu0 %v994
      %v1077 = vpop.f32.mrf.mxu0
      %v1078 = vadd.f32 0.0, %v1077
      %1079 = vdwg.mxu0
      %1080 = vmatpush.msra.mxu0 0.0
      %1081 = vmatpush.msra.mxu0 0.0
      %1082 = vmatpush.msra.mxu0 0.0
      %1083 = vmatpush.msra.mxu0 0.0
      %1084 = vmatpush.msra.mxu0 0.0
      %1085 = vmatpush.msra.mxu0 %v1048
      %1086 = vmatpush.msra.mxu0 %v1046
      %1087 = vmatpush.msra.mxu0 %v1044
      %1088 = vmatpush.msra.mxu0 %v1042
      %1089 = vmatpush.msra.mxu0 %v1040
      %1090 = vmatpush.msra.mxu0 %v1038
      %1091 = vmatpush.msra.mxu0 %v1036
      %1092 = vmatpush.msra.mxu0 %v1034
      %1093 = vmatpush.msra.mxu0 %v1032
      %1094 = vmatpush.msra.mxu0 %v1030
      %1095 = vmatpush.msra.mxu0 %v1028
      %1096 = vmatmul.f32.gmra.mxu0 %v1052
      %v1097 = vpop.f32.mrf.mxu0
      %v1098 = vadd.f32 %v1075, %v1097
      %1099 = vmatmul.f32.gmra.mxu0 %v1055
      %v1100 = vpop.f32.mrf.mxu0
      %v1101 = vadd.f32 %v1078, %v1100
      %1102 = vdwg.mxu0
      %1103 = vmatpush.msra.mxu0 %v1027
      %1104 = vmatpush.msra.mxu0 %v1025
      %1105 = vmatpush.msra.mxu0 %v1023
      %1106 = vmatpush.msra.mxu0 %v1021
      %1107 = vmatpush.msra.mxu0 %v1019
      %1108 = vmatpush.msra.mxu0 %v1017
      %1109 = vmatpush.msra.mxu0 %v1015
      %1110 = vmatpush.msra.mxu0 %v1013
      %1111 = vmatpush.msra.mxu0 %v1011
      %1112 = vmatpush.msra.mxu0 %v1009
      %1113 = vmatpush.msra.mxu0 %v1007
      %1114 = vmatpush.msra.mxu0 %v1005
      %1115 = vmatpush.msra.mxu0 %v1003
      %1116 = vmatpush.msra.mxu0 %v1001
      %1117 = vmatpush.msra.mxu0 %v999
      %1118 = vmatpush.msra.mxu0 %v997
      %1119 = vmatmul.f32.gmra.mxu0 %v992
      %v1120 = vpop.f32.mrf.mxu0
      %v1121 = vadd.f32 0.0, %v1120
      %1122 = vmatmul.f32.gmra.mxu0 %v994
      %v1123 = vpop.f32.mrf.mxu0
      %v1124 = vadd.f32 0.0, %v1123
      %1125 = vdwg.mxu0
      %1126 = vmatpush.msra.mxu0 0.0
      %1127 = vmatpush.msra.mxu0 0.0
      %1128 = vmatpush.msra.mxu0 0.0
      %1129 = vmatpush.msra.mxu0 0.0
      %1130 = vmatpush.msra.mxu0 0.0
      %1131 = vmatpush.msra.mxu0 %v1049
      %1132 = vmatpush.msra.mxu0 %v1047
      %1133 = vmatpush.msra.mxu0 %v1045
      %1134 = vmatpush.msra.mxu0 %v1043
      %1135 = vmatpush.msra.mxu0 %v1041
      %1136 = vmatpush.msra.mxu0 %v1039
      %1137 = vmatpush.msra.mxu0 %v1037
      %1138 = vmatpush.msra.mxu0 %v1035
      %1139 = vmatpush.msra.mxu0 %v1033
      %1140 = vmatpush.msra.mxu0 %v1031
      %1141 = vmatpush.msra.mxu0 %v1029
      %1142 = vmatmul.f32.gmra.mxu0 %v1052
      %v1143 = vpop.f32.mrf.mxu0
      %v1144 = vadd.f32 %v1121, %v1143
      %1145 = vmatmul.f32.gmra.mxu0 %v1055
      %v1146 = vpop.f32.mrf.mxu0
      %v1147 = vadd.f32 %v1124, %v1146
      %1148 = vdwg.mxu0
      %v1149 = vxor.u32 %v1098, 2147483648
      %v1150 = vxor.u32 %v1144, 2147483648
      %v1151 = vxor.u32 %v1101, 2147483648
      %v1152 = vxor.u32 %v1147, 2147483648
      %v1153 = vmul.f32 %v1149, 1.442695
      %v1154 = vpow.pop %v1153
      %v1155 = vmul.f32 %v1150, 1.442695
      %v1156 = vpow.pop %v1155
      %v1157 = vmul.f32 %v1151, 1.442695
      %v1158 = vpow.pop %v1157
      %v1159 = vmul.f32 %v1152, 1.442695
      %v1160 = vpow.pop %v1159
      %v1161 = vadd.f32 %v1154, 1.0
      %v1162 = vadd.f32 %v1156, 1.0
      %v1163 = vadd.f32 %v1158, 1.0
      %v1164 = vadd.f32 %v1160, 1.0
      %v1165 = vrcp.pop %v1161
      %v1166 = vmul.f32 %v1161, %v1165
      %v1167 = vsub.f32 1.0, %v1166
      %v1168 = vmul.f32 %v1165, %v1167
      %v1169 = vadd.f32 %v1165, %v1168
      %vm1170 = vweird.f32 %v1161
      %vm1171 = vweird.f32 %v1165
      %vm1172 = vmor %vm1170, %vm1171
      %v1173 = vsel %vm1172, %v1165, %v1169
      %v1174 = vand.u32 2147483647, %v1161
      %vm1175 = vcmp.eq.f32.partialorder %v1174, 8.507059e+37
      %v1176 = vand.u32 %v1161, 2147483648
      %v1177 = vor.u32 1.1754944e-38, %v1176
      %v1178 = vsel %vm1175, %v1177, %v1173
      %v1179 = vmul.f32 1.0, %v1178
      %v1180 = vrcp.pop %v1162
      %v1181 = vmul.f32 %v1162, %v1180
      %v1182 = vsub.f32 1.0, %v1181
      %v1183 = vmul.f32 %v1180, %v1182
      %v1184 = vadd.f32 %v1180, %v1183
      %vm1185 = vweird.f32 %v1162
      %vm1186 = vweird.f32 %v1180
      %vm1187 = vmor %vm1185, %vm1186
      %v1188 = vsel %vm1187, %v1180, %v1184
      %v1189 = vand.u32 2147483647, %v1162
      %vm1190 = vcmp.eq.f32.partialorder %v1189, 8.507059e+37
      %v1191 = vand.u32 %v1162, 2147483648
      %v1192 = vor.u32 1.1754944e-38, %v1191
      %v1193 = vsel %vm1190, %v1192, %v1188
      %v1194 = vmul.f32 1.0, %v1193
      %v1195 = vrcp.pop %v1163
      %v1196 = vmul.f32 %v1163, %v1195
      %v1197 = vsub.f32 1.0, %v1196
      %v1198 = vmul.f32 %v1195, %v1197
      %v1199 = vadd.f32 %v1195, %v1198
      %vm1200 = vweird.f32 %v1163
      %vm1201 = vweird.f32 %v1195
      %vm1202 = vmor %vm1200, %vm1201
      %v1203 = vsel %vm1202, %v1195, %v1199
      %v1204 = vand.u32 2147483647, %v1163
      %vm1205 = vcmp.eq.f32.partialorder %v1204, 8.507059e+37
      %v1206 = vand.u32 %v1163, 2147483648
      %v1207 = vor.u32 1.1754944e-38, %v1206
      %v1208 = vsel %vm1205, %v1207, %v1203
      %v1209 = vmul.f32 1.0, %v1208
      %v1210 = vrcp.pop %v1164
      %v1211 = vmul.f32 %v1164, %v1210
      %v1212 = vsub.f32 1.0, %v1211
      %v1213 = vmul.f32 %v1210, %v1212
      %v1214 = vadd.f32 %v1210, %v1213
      %vm1215 = vweird.f32 %v1164
      %vm1216 = vweird.f32 %v1210
      %vm1217 = vmor %vm1215, %vm1216
      %v1218 = vsel %vm1217, %v1210, %v1214
      %v1219 = vand.u32 2147483647, %v1164
      %vm1220 = vcmp.eq.f32.partialorder %v1219, 8.507059e+37
      %v1221 = vand.u32 %v1164, 2147483648
      %v1222 = vor.u32 1.1754944e-38, %v1221
      %v1223 = vsel %vm1220, %v1222, %v1218
      %v1224 = vmul.f32 1.0, %v1223
      %v1225 = vmul.f32 %v1098, %v1179
      %v1226 = vmul.f32 %v1144, %v1194
      %v1227 = vmul.f32 %v1101, %v1209
      %v1228 = vmul.f32 %v1147, %v1224
      %vm1233 = vcmask 1044480
      %v1234 = vrot.slane %v1225, 3
      %v1235 = vrot.slane %v1226, 3
      %v1236 = vrot.slane %v1227, 3
      %v1237 = vsel %vm1233, %v1234, %v1236
      %v1238 = vrot.slane %v1228, 3
      %v1239 = vsel %vm1233, %v1235, %v1238
      %v1244 = vsel %vm1233, %v651, %v1234
      %v1245 = vsel %vm1233, %v652, %v1235
      %1246 = vst [vmem:[%s197] sm:$0xff] %v647
      %1247 = vst [vmem:[%s197 + $0x8] sm:$0xff] %v648
      %1248 = vst [vmem:[%s197 + $0x10] sm:$0xff] %v649
      %1249 = vst [vmem:[%s197 + $0x18] sm:$0xff] %v650
      %1250 = vst [vmem:[%s197 + $0x20] sm:$0xff] %v1244
      %1251 = vst [vmem:[%s197 + $0x28] sm:$0xff] %v1245
      %1252 = vst [vmem:[%s197 + $0x30] sm:$0xff] %v1237
      %1253 = vst [vmem:[%s197 + $0x38] sm:$0xff] %v1239
      %p1254 = scmp.lt.s32.totalorder %s15, 1
      %s1255 = scalar_select %p1254, %s15, 1
      %s1256 = smul.addr %s1255, 8
      %s1257 = smul.addr %s1256, 8
      %s1258 = scalar_lea.vmem %s4, %s1257
      // Predicated region
      $region37: #{edge_encoder_forward.1} parent=35 // pred_check
        %p1259 = pneg %p122
      $region38: #{edge_encoder_forward.1} parent=35 // pred_check_branch
        %1261 = sbr.rel (%p1259) target = $region40
      $region39: #{edge_encoder_forward.1} parent=35 // pred_region
        _
      $region40: #{edge_encoder_forward.1} parent=35 // pred_fallthru
        _
    $region36: #{edge_encoder_forward.1} parent=5 // pred_fallthru
      _
    %p1262 = scmp.le.s32.totalorder 2, %s10
    // Predicated region
    $region41: #{edge_encoder_forward.1} parent=5 // pred_check
      %p1263 = pneg %p1262
    $region42: #{edge_encoder_forward.1} parent=5 // pred_check_branch
      %1265 = sbr.rel (%p1263) target = $region44
    $region43: #{edge_encoder_forward.1} parent=5 // pred_region
      %s1266 = ssub.s32 %s10, 2
      // Predicated region
      $region45: #{edge_encoder_forward.1} parent=43 // pred_check
        %p1267 = pneg %p128
      $region46: #{edge_encoder_forward.1} parent=43 // pred_check_branch
        %1269 = sbr.rel (%p1267) target = $region48
      $region47: #{edge_encoder_forward.1} parent=43 // pred_region
        %p1270 = scmp.lt.s32.totalorder %s16, 1
        %s1271 = scalar_select %p1270, %s16, 1
        %s1272 = smul.addr %s1271, 8
        %s1273 = smul.addr %s1272, 8
        %s1274 = scalar_lea.vmem %s4, %s1273
      $region48: #{edge_encoder_forward.1} parent=43 // pred_fallthru
        _
    $region44: #{edge_encoder_forward.1} parent=5 // pred_fallthru
      _
  $region6: #{edge_encoder_forward.1} parent=0 // loop_footer
    %s14 = sadd.s32 1, %s10
  $region7: #{edge_encoder_forward.1} parent=0 // loop_footer_branch
    %9 = sbr.rel target = $region3
  $region8: #{edge_encoder_forward.1} parent=0 // loop_exit
    _

</llo_original>
